<compile_context>
chip_gen: v6e
topology: v6e:2x2x1
jax: 0.10.0
libtpu: 0.0.40
codegen_flags: <defaults>
</compile_context>

<pallas_src>
from functools import partial

import jax
import jax.numpy as jnp
from jax.experimental import pallas as pl
from jax.experimental.pallas import tpu as pltpu


def _conv2d_relu_kernel(x_ref, w_ref, o_ref, patches_ref, *, kh, kw, w_dim, cin):
    # x_ref:       (NB, Cin, H*W)   flattened NCHW (free wrapper reshape)
    # w_ref:       (Cout, K)        K = KH*KW*Cin, k ordered (i, j, c)
    # o_ref:       (NB, Cout, H*W)  lane-dense (H*W lanes per store)
    # patches_ref: (K, NB*H*W)      VMEM im2col scratch
    nb = x_ref.shape[0]
    hw = x_ref.shape[2]

    w2 = w_ref[...]                                   # (Cout, K), resident

    # im2col into the VMEM scratch: one full-lane-width XLU roll per tap/image.
    for n in range(nb):                               # small static unroll
        img = x_ref[n]                                # (Cin, H*W)
        for t in range(kh * kw):
            i, j = divmod(t, kw)
            s = i * w_dim + j
            # tap[:, m] = img[:, (m + s) % hw]  (wraps only into cropped junk)
            tap = img if s == 0 else pltpu.roll(img, hw - s, 1)
            patches_ref[t * cin:(t + 1) * cin, n * hw:(n + 1) * hw] = tap

    # One fused MXU matmul for the whole block, f32 accumulation.
    acc = jnp.dot(w2, patches_ref[...], preferred_element_type=jnp.float32)

    # Fused ReLU + full-lane-width stores (no masked 196-lane tails).
    for n in range(nb):
        o_ref[n] = jnp.maximum(acc[:, n * hw:(n + 1) * hw], 0.0).astype(o_ref.dtype)


def _pick_batch_block(n, cin, cout, k, hw, itemsize, vmem_budget=8 << 20):
    """Largest divisor of n whose per-step VMEM working set fits the budget.

    Working set = double-buffered input/output blocks + resident weights +
    the f32 im2col scratch.  For small problems this returns nb = n, i.e. a
    single grid step (no extra per-step overhead on the serial TC loop)."""
    def step_bytes(nb):
        x_buf = 2 * nb * cin * hw * itemsize      # double-buffered input block
        o_buf = 2 * nb * cout * hw * itemsize     # double-buffered output block
        w_buf = 2 * cout * k * itemsize           # resident weights
        scratch = k * nb * hw * 4                 # f32 im2col scratch
        return x_buf + o_buf + w_buf + scratch

    for nb in range(n, 0, -1):
        if n % nb == 0 and step_bytes(nb) <= vmem_budget:
            return nb
    return 1


def conv2d_relu(x_nchw, w_oihw, *, stride=1):
    """F.relu(F.conv2d(x, w, bias=None, stride=1, padding=0)) on TPU via Pallas."""
    assert stride == 1, "kernel implements stride=1 (the Conv2dRelu_Fixed config)"
    n, cin, h, w = x_nchw.shape
    cout, cin_w, kh, kw = w_oihw.shape
    assert cin == cin_w
    oh, ow = h - kh + 1, w - kw + 1
    hw = h * w
    k = kh * kw * cin

    # Free trailing-dim merge: (N, Cin, H, W) -> (N, Cin, H*W).
    x_flat = x_nchw.reshape(n, cin, hw)
    # Weight: (Cout, Cin, KH, KW) -> (Cout, K), k = (i*KW + j)*Cin + c.
    # Tiny one-time rearrangement (Cout*Cin*KH*KW = 288 elements here).
    w2 = jnp.transpose(w_oihw, (0, 2, 3, 1)).reshape(cout, k)

    itemsize = jnp.dtype(x_nchw.dtype).itemsize
    nb = _pick_batch_block(n, cin, cout, k, hw, itemsize)
    grid = (n // nb,)

    kernel = partial(_conv2d_relu_kernel, kh=kh, kw=kw, w_dim=w, cin=cin)

    out_flat = pl.pallas_call(
        kernel,
        out_shape=jax.ShapeDtypeStruct((n, cout, hw), x_nchw.dtype),
        grid_spec=pltpu.PrefetchScalarGridSpec(
            num_scalar_prefetch=0,
            grid=grid,
            in_specs=[
                pl.BlockSpec((nb, cin, hw), lambda b: (b, 0, 0)),
                pl.BlockSpec((cout, k), lambda b: (0, 0)),   # weights resident
            ],
            out_specs=pl.BlockSpec((nb, cout, hw), lambda b: (b, 0, 0)),
            scratch_shapes=[pltpu.VMEM((k, nb * hw), jnp.float32)],
        ),
        compiler_params=pltpu.CompilerParams(
            dimension_semantics=("parallel",)),
    )(x_flat, w2)

    # Free split of the trailing lane-dense axis back to (H, W), then crop the
    # junk columns (oc >= OW) and junk rows (or >= OH) of the wide compute.
    return out_flat.reshape(n, cout, h, w)[:, :, :oh, :ow]


def init_conv_weight(key, in_channels, out_channels, kh, kw):
    # Matches nn.Conv2d default init distribution: kaiming_uniform(a=sqrt(5))
    # => U(-1/sqrt(fan_in), 1/sqrt(fan_in)). Deterministic via PRNGKey.
    fan_in = in_channels * kh * kw
    bound = 1.0 / (fan_in ** 0.5)
    return jax.random.uniform(
        key, (out_channels, in_channels, kh, kw),
        minval=-bound, maxval=bound, dtype=jnp.float32)


if __name__ == "__main__":
    key = jax.random.PRNGKey(0)
    kx, kw_ = jax.random.split(key)

    N, CIN, H, W = 2, 4, 16, 16
    COUT, KH, KW = 8, 3, 3

    x = jax.random.normal(kx, (N, CIN, H, W), dtype=jnp.float32)
    w = init_conv_weight(kw_, CIN, COUT, KH, KW)

    out = jax.block_until_ready(conv2d_relu(x, w))

    # Sanity check against the XLA reference conv + relu.
    ref = jax.lax.conv_general_dilated(
        x, w, window_strides=(1, 1), padding="VALID",
        dimension_numbers=("NCHW", "OIHW", "NCHW"))
    ref = jnp.maximum(ref, 0.0)
    assert out.shape == (N, COUT, H - KH + 1, W - KW + 1)
    assert jnp.allclose(out, ref, atol=1e-4, rtol=1e-4)

    print("KERNEL_OK")
</pallas_src>

<mosaic_0001>
module attributes {stable_mosaic.version = 11 : i64} {
  func.func @_conv2d_relu_kernel(%arg0: i32, %arg1: memref<2x4x256xf32, #tpu.memory_space<vmem>>, %arg2: memref<8x36xf32, #tpu.memory_space<vmem>>, %arg3: memref<2x8x256xf32, #tpu.memory_space<vmem>>, %arg4: memref<36x512xf32, #tpu.memory_space<vmem>>) attributes {dimension_semantics = [#tpu.dimension_semantics<parallel>], iteration_bounds = array<i64: 1>, scalar_prefetch = 0 : i64, scratch_operands = 1 : i64, tpu.core_type = #tpu.core_type<tc>, window_params = [{transform_indices = @transform_0, window_bounds = array<i64: 2, 4, 256>}, {pipeline_mode = #tpu.pipeline_mode<synchronous>, transform_indices = @transform_1, window_bounds = array<i64: 8, 36>}, {transform_indices = @transform_2, window_bounds = array<i64: 2, 8, 256>}]} {
    %c0 = arith.constant 0 : index
    %c0_0 = arith.constant 0 : index
    %0 = vector.load %arg2[%c0, %c0_0] : memref<8x36xf32, #tpu.memory_space<vmem>>, vector<8x36xf32>
    %c0_1 = arith.constant 0 : index
    %c0_2 = arith.constant 0 : index
    %c0_3 = arith.constant 0 : index
    %1 = vector.load %arg1[%c0_1, %c0_2, %c0_3] : memref<2x4x256xf32, #tpu.memory_space<vmem>>, vector<1x4x256xf32>
    %2 = vector.shape_cast %1 : vector<1x4x256xf32> to vector<4x256xf32>
    %c0_4 = arith.constant 0 : index
    %c0_5 = arith.constant 0 : index
    %3 = vector.load %arg4[%c0_4, %c0_5] : memref<36x512xf32, #tpu.memory_space<vmem>>, vector<4x256xf32>
    tpu.vector_store %arg4[%c0_4, %c0_5], %2 {strides = array<i32>} : memref<36x512xf32, #tpu.memory_space<vmem>>, vector<4x256xf32>,
    %c255_i32 = arith.constant 255 : i32
    %4 = tpu.dynamic_rotate %2 by %c255_i32 dim 1 : vector<4x256xf32>, i32 -> vector<4x256xf32>
    %c4 = arith.constant 4 : index
    %c0_6 = arith.constant 0 : index
    %5 = vector.load %arg4[%c4, %c0_6] : memref<36x512xf32, #tpu.memory_space<vmem>>, vector<4x256xf32>
    tpu.vector_store %arg4[%c4, %c0_6], %4 {strides = array<i32>} : memref<36x512xf32, #tpu.memory_space<vmem>>, vector<4x256xf32>,
    %c254_i32 = arith.constant 254 : i32
    %6 = tpu.dynamic_rotate %2 by %c254_i32 dim 1 : vector<4x256xf32>, i32 -> vector<4x256xf32>
    %c8 = arith.constant 8 : index
    %c0_7 = arith.constant 0 : index
    %7 = vector.load %arg4[%c8, %c0_7] : memref<36x512xf32, #tpu.memory_space<vmem>>, vector<4x256xf32>
    tpu.vector_store %arg4[%c8, %c0_7], %6 {strides = array<i32>} : memref<36x512xf32, #tpu.memory_space<vmem>>, vector<4x256xf32>,
    %c240_i32 = arith.constant 240 : i32
    %8 = tpu.dynamic_rotate %2 by %c240_i32 dim 1 : vector<4x256xf32>, i32 -> vector<4x256xf32>
    %c12 = arith.constant 12 : index
    %c0_8 = arith.constant 0 : index
    %9 = vector.load %arg4[%c12, %c0_8] : memref<36x512xf32, #tpu.memory_space<vmem>>, vector<4x256xf32>
    tpu.vector_store %arg4[%c12, %c0_8], %8 {strides = array<i32>} : memref<36x512xf32, #tpu.memory_space<vmem>>, vector<4x256xf32>,
    %c239_i32 = arith.constant 239 : i32
    %10 = tpu.dynamic_rotate %2 by %c239_i32 dim 1 : vector<4x256xf32>, i32 -> vector<4x256xf32>
    %c16 = arith.constant 16 : index
    %c0_9 = arith.constant 0 : index
    %11 = vector.load %arg4[%c16, %c0_9] : memref<36x512xf32, #tpu.memory_space<vmem>>, vector<4x256xf32>
    tpu.vector_store %arg4[%c16, %c0_9], %10 {strides = array<i32>} : memref<36x512xf32, #tpu.memory_space<vmem>>, vector<4x256xf32>,
    %c238_i32 = arith.constant 238 : i32
    %12 = tpu.dynamic_rotate %2 by %c238_i32 dim 1 : vector<4x256xf32>, i32 -> vector<4x256xf32>
    %c20 = arith.constant 20 : index
    %c0_10 = arith.constant 0 : index
    %13 = vector.load %arg4[%c20, %c0_10] : memref<36x512xf32, #tpu.memory_space<vmem>>, vector<4x256xf32>
    tpu.vector_store %arg4[%c20, %c0_10], %12 {strides = array<i32>} : memref<36x512xf32, #tpu.memory_space<vmem>>, vector<4x256xf32>,
    %c224_i32 = arith.constant 224 : i32
    %14 = tpu.dynamic_rotate %2 by %c224_i32 dim 1 : vector<4x256xf32>, i32 -> vector<4x256xf32>
    %c24 = arith.constant 24 : index
    %c0_11 = arith.constant 0 : index
    %15 = vector.load %arg4[%c24, %c0_11] : memref<36x512xf32, #tpu.memory_space<vmem>>, vector<4x256xf32>
    tpu.vector_store %arg4[%c24, %c0_11], %14 {strides = array<i32>} : memref<36x512xf32, #tpu.memory_space<vmem>>, vector<4x256xf32>,
    %c223_i32 = arith.constant 223 : i32
    %16 = tpu.dynamic_rotate %2 by %c223_i32 dim 1 : vector<4x256xf32>, i32 -> vector<4x256xf32>
    %c28 = arith.constant 28 : index
    %c0_12 = arith.constant 0 : index
    %17 = vector.load %arg4[%c28, %c0_12] : memref<36x512xf32, #tpu.memory_space<vmem>>, vector<4x256xf32>
    tpu.vector_store %arg4[%c28, %c0_12], %16 {strides = array<i32>} : memref<36x512xf32, #tpu.memory_space<vmem>>, vector<4x256xf32>,
    %c222_i32 = arith.constant 222 : i32
    %18 = tpu.dynamic_rotate %2 by %c222_i32 dim 1 : vector<4x256xf32>, i32 -> vector<4x256xf32>
    %c32 = arith.constant 32 : index
    %c0_13 = arith.constant 0 : index
    %19 = vector.load %arg4[%c32, %c0_13] : memref<36x512xf32, #tpu.memory_space<vmem>>, vector<4x256xf32>
    tpu.vector_store %arg4[%c32, %c0_13], %18 {strides = array<i32>} : memref<36x512xf32, #tpu.memory_space<vmem>>, vector<4x256xf32>,
    %c1 = arith.constant 1 : index
    %c0_14 = arith.constant 0 : index
    %c0_15 = arith.constant 0 : index
    %20 = vector.load %arg1[%c1, %c0_14, %c0_15] : memref<2x4x256xf32, #tpu.memory_space<vmem>>, vector<1x4x256xf32>
    %21 = vector.shape_cast %20 : vector<1x4x256xf32> to vector<4x256xf32>
    %c0_16 = arith.constant 0 : index
    %c256 = arith.constant 256 : index
    %22 = vector.load %arg4[%c0_16, %c256] : memref<36x512xf32, #tpu.memory_space<vmem>>, vector<4x256xf32>
    tpu.vector_store %arg4[%c0_16, %c256], %21 {strides = array<i32>} : memref<36x512xf32, #tpu.memory_space<vmem>>, vector<4x256xf32>,
    %c255_i32_17 = arith.constant 255 : i32
    %23 = tpu.dynamic_rotate %21 by %c255_i32_17 dim 1 : vector<4x256xf32>, i32 -> vector<4x256xf32>
    %c4_18 = arith.constant 4 : index
    %c256_19 = arith.constant 256 : index
    %24 = vector.load %arg4[%c4_18, %c256_19] : memref<36x512xf32, #tpu.memory_space<vmem>>, vector<4x256xf32>
    tpu.vector_store %arg4[%c4_18, %c256_19], %23 {strides = array<i32>} : memref<36x512xf32, #tpu.memory_space<vmem>>, vector<4x256xf32>,
    %c254_i32_20 = arith.constant 254 : i32
    %25 = tpu.dynamic_rotate %21 by %c254_i32_20 dim 1 : vector<4x256xf32>, i32 -> vector<4x256xf32>
    %c8_21 = arith.constant 8 : index
    %c256_22 = arith.constant 256 : index
    %26 = vector.load %arg4[%c8_21, %c256_22] : memref<36x512xf32, #tpu.memory_space<vmem>>, vector<4x256xf32>
    tpu.vector_store %arg4[%c8_21, %c256_22], %25 {strides = array<i32>} : memref<36x512xf32, #tpu.memory_space<vmem>>, vector<4x256xf32>,
    %c240_i32_23 = arith.constant 240 : i32
    %27 = tpu.dynamic_rotate %21 by %c240_i32_23 dim 1 : vector<4x256xf32>, i32 -> vector<4x256xf32>
    %c12_24 = arith.constant 12 : index
    %c256_25 = arith.constant 256 : index
    %28 = vector.load %arg4[%c12_24, %c256_25] : memref<36x512xf32, #tpu.memory_space<vmem>>, vector<4x256xf32>
    tpu.vector_store %arg4[%c12_24, %c256_25], %27 {strides = array<i32>} : memref<36x512xf32, #tpu.memory_space<vmem>>, vector<4x256xf32>,
    %c239_i32_26 = arith.constant 239 : i32
    %29 = tpu.dynamic_rotate %21 by %c239_i32_26 dim 1 : vector<4x256xf32>, i32 -> vector<4x256xf32>
    %c16_27 = arith.constant 16 : index
    %c256_28 = arith.constant 256 : index
    %30 = vector.load %arg4[%c16_27, %c256_28] : memref<36x512xf32, #tpu.memory_space<vmem>>, vector<4x256xf32>
    tpu.vector_store %arg4[%c16_27, %c256_28], %29 {strides = array<i32>} : memref<36x512xf32, #tpu.memory_space<vmem>>, vector<4x256xf32>,
    %c238_i32_29 = arith.constant 238 : i32
    %31 = tpu.dynamic_rotate %21 by %c238_i32_29 dim 1 : vector<4x256xf32>, i32 -> vector<4x256xf32>
    %c20_30 = arith.constant 20 : index
    %c256_31 = arith.constant 256 : index
    %32 = vector.load %arg4[%c20_30, %c256_31] : memref<36x512xf32, #tpu.memory_space<vmem>>, vector<4x256xf32>
    tpu.vector_store %arg4[%c20_30, %c256_31], %31 {strides = array<i32>} : memref<36x512xf32, #tpu.memory_space<vmem>>, vector<4x256xf32>,
    %c224_i32_32 = arith.constant 224 : i32
    %33 = tpu.dynamic_rotate %21 by %c224_i32_32 dim 1 : vector<4x256xf32>, i32 -> vector<4x256xf32>
    %c24_33 = arith.constant 24 : index
    %c256_34 = arith.constant 256 : index
    %34 = vector.load %arg4[%c24_33, %c256_34] : memref<36x512xf32, #tpu.memory_space<vmem>>, vector<4x256xf32>
    tpu.vector_store %arg4[%c24_33, %c256_34], %33 {strides = array<i32>} : memref<36x512xf32, #tpu.memory_space<vmem>>, vector<4x256xf32>,
    %c223_i32_35 = arith.constant 223 : i32
    %35 = tpu.dynamic_rotate %21 by %c223_i32_35 dim 1 : vector<4x256xf32>, i32 -> vector<4x256xf32>
    %c28_36 = arith.constant 28 : index
    %c256_37 = arith.constant 256 : index
    %36 = vector.load %arg4[%c28_36, %c256_37] : memref<36x512xf32, #tpu.memory_space<vmem>>, vector<4x256xf32>
    tpu.vector_store %arg4[%c28_36, %c256_37], %35 {strides = array<i32>} : memref<36x512xf32, #tpu.memory_space<vmem>>, vector<4x256xf32>,
    %c222_i32_38 = arith.constant 222 : i32
    %37 = tpu.dynamic_rotate %21 by %c222_i32_38 dim 1 : vector<4x256xf32>, i32 -> vector<4x256xf32>
    %c32_39 = arith.constant 32 : index
    %c256_40 = arith.constant 256 : index
    %38 = vector.load %arg4[%c32_39, %c256_40] : memref<36x512xf32, #tpu.memory_space<vmem>>, vector<4x256xf32>
    tpu.vector_store %arg4[%c32_39, %c256_40], %37 {strides = array<i32>} : memref<36x512xf32, #tpu.memory_space<vmem>>, vector<4x256xf32>,
    %c0_41 = arith.constant 0 : index
    %c0_42 = arith.constant 0 : index
    %39 = vector.load %arg4[%c0_41, %c0_42] : memref<36x512xf32, #tpu.memory_space<vmem>>, vector<36x512xf32>
    %cst = arith.constant dense<0.000000e+00> : vector<8x512xf32>
    %40 = tpu.matmul %0, %39, %cst {dimension_numbers = #tpu.dot_dimension_numbers<[1], [0], [0], [1], [0, 0, 1, 1], [], []>} : vector<8x36xf32>, vector<36x512xf32>, vector<8x512xf32> -> vector<8x512xf32>
    %41 = vector.extract_strided_slice %40 {offsets = [0, 0], sizes = [8, 256], strides = [1, 1]} : vector<8x512xf32> to vector<8x256xf32>
    %cst_43 = arith.constant 0.000000e+00 : f32
    %42 = vector.broadcast %cst_43 : f32 to vector<8x256xf32>
    %43 = arith.maximumf %41, %42 : vector<8x256xf32>
    %c0_44 = arith.constant 0 : index
    %c0_45 = arith.constant 0 : index
    %c0_46 = arith.constant 0 : index
    %44 = vector.load %arg3[%c0_44, %c0_45, %c0_46] : memref<2x8x256xf32, #tpu.memory_space<vmem>>, vector<1x8x256xf32>
    %45 = vector.shape_cast %44 : vector<1x8x256xf32> to vector<8x256xf32>
    %46 = vector.shape_cast %43 : vector<8x256xf32> to vector<1x8x256xf32>
    tpu.vector_store %arg3[%c0_44, %c0_45, %c0_46], %46 {strides = array<i32>} : memref<2x8x256xf32, #tpu.memory_space<vmem>>, vector<1x8x256xf32>,
    %47 = vector.extract_strided_slice %40 {offsets = [0, 256], sizes = [8, 256], strides = [1, 1]} : vector<8x512xf32> to vector<8x256xf32>
    %cst_47 = arith.constant 0.000000e+00 : f32
    %48 = vector.broadcast %cst_47 : f32 to vector<8x256xf32>
    %49 = arith.maximumf %47, %48 : vector<8x256xf32>
    %c1_48 = arith.constant 1 : index
    %c0_49 = arith.constant 0 : index
    %c0_50 = arith.constant 0 : index
    %50 = vector.load %arg3[%c1_48, %c0_49, %c0_50] : memref<2x8x256xf32, #tpu.memory_space<vmem>>, vector<1x8x256xf32>
    %51 = vector.shape_cast %50 : vector<1x8x256xf32> to vector<8x256xf32>
    %52 = vector.shape_cast %49 : vector<8x256xf32> to vector<1x8x256xf32>
    tpu.vector_store %arg3[%c1_48, %c0_49, %c0_50], %52 {strides = array<i32>} : memref<2x8x256xf32, #tpu.memory_space<vmem>>, vector<1x8x256xf32>,
    return
  }
  func.func @transform_0(%arg0: i32) -> (i32, i32, i32) {
    %c0_i32 = arith.constant 0 : i32
    %c0_i32_0 = arith.constant 0 : i32
    %c0_i32_1 = arith.constant 0 : i32
    return %arg0, %c0_i32, %c0_i32_0 : i32, i32, i32
  }
  func.func @transform_1(%arg0: i32) -> (i32, i32) {
    %c0_i32 = arith.constant 0 : i32
    %c0_i32_0 = arith.constant 0 : i32
    %c0_i32_1 = arith.constant 0 : i32
    return %c0_i32, %c0_i32_0 : i32, i32
  }
  func.func @transform_2(%arg0: i32) -> (i32, i32, i32) {
    %c0_i32 = arith.constant 0 : i32
    %c0_i32_0 = arith.constant 0 : i32
    %c0_i32_1 = arith.constant 0 : i32
    return %arg0, %c0_i32, %c0_i32_0 : i32, i32, i32
  }
}

</mosaic_0001>

<llo_original>
// kernel: tpu_custom_call.1
$region0: #{tpu_custom_call.1}
  #allocation0 [shape = 'u32[]', space=smem, size = 0x4, offset = 0x4, fixed_abs, tag = 'smem constant byte address 0x4 - core index']
  #allocation1 [shape = 'u32[144,128]{1,0:T(1,128)}', space=vmem, size = 0x12000, scoped, tag = 'internal scratch']
  #allocation2 [shape = 'f32[36,512]{1,0:T(8,128)}', space=vmem, size = 0x14000, scoped, tag = 'scratch operand']
  %s0 = inlined_call_operand.hbm [shape: f32[2,4,256], index: 0, kind: input, shape index: {}]
  %s1 = inlined_call_operand.hbm [shape: f32[8,36], index: 1, kind: input, shape index: {}]
  %s2 = inlined_call_operand.hbm [shape: f32[2,8,256], index: 2, kind: output, shape index: {}]
  %s3 = sld [smem:[#allocation0]]
  $region26: #{tpu_custom_call.1} parent=0
    _
  %s5 = ssub.s32 1, %s3
  %s6 = scalar_select 0, %s5, %s3
  $region1: #{tpu_custom_call.1} parent=0
    #allocation3 [shape = 'u8[8192]{0}', space=vmem, size = 0x2000, scoped, tag = 'input window, operand 0, single buffered']
    #allocation4 [shape = 's32[1]{0}', space=sflag, size = 0x4, scoped, tag = 'scoped memory for tpu_custom_call.1']
    #allocation5 [shape = 's32[1]{0}', space=sflag, size = 0x4, scoped, tag = 'scoped memory for tpu_custom_call.1']
    #allocation6 [shape = 'u8[4096]{0}', space=vmem, size = 0x1000, scoped, tag = 'input window, operand 1, single buffered']
    #allocation7 [shape = 's32[1]{0}', space=sflag, size = 0x4, scoped, tag = 'scoped memory for tpu_custom_call.1']
    #allocation8 [shape = 'u8[16384]{0}', space=vmem, size = 0x4000, scoped, tag = 'output window, operand 0, single buffered']
    %7 = vsyncpa [#allocation4], 0
    %8 = vsyncpa [#allocation7], 0
    %9 = vsyncpa [#allocation5], 0
    // Predicated region
    $region2: #{tpu_custom_call.1} parent=1 // pred_check
      _
    $region3: #{tpu_custom_call.1} parent=1 // pred_check_branch
      %11 = sbr.rel (0) target = $region5
    $region4: #{tpu_custom_call.1} parent=1 // pred_region
      %s13 = ssub.s32 256, 256
      %14 = vsyncadd [#allocation4], %s13
      %s15 = sshll.u32 [#allocation3], 4
      %s16 = int_to_ptr.vmem [resolvable:$true] %s15
      %21 = dma.hbm_to_vmem [thread:$0]  %s0, 256, %s16, [#allocation4], 128, 128, 8
    $region5: #{tpu_custom_call.1} parent=1 // pred_fallthru
      _
    // Predicated region
    $region6: #{tpu_custom_call.1} parent=1 // pred_check
      _
    $region7: #{tpu_custom_call.1} parent=1 // pred_check_branch
      %23 = sbr.rel (0) target = $region9
    $region8: #{tpu_custom_call.1} parent=1 // pred_region
      %s25 = ssub.s32 128, 128
      %26 = vsyncadd [#allocation7], %s25
      %s28 = sshll.u32 [#allocation6], 4
      %s29 = int_to_ptr.vmem [resolvable:$true] %s28
      %31 = dma.hbm_to_vmem [thread:$0]  %s1, 128, %s29, [#allocation7]
    $region9: #{tpu_custom_call.1} parent=1 // pred_fallthru
      _
    // Predicated region
    $region10: #{tpu_custom_call.1} parent=1 // pred_check
      _
    $region11: #{tpu_custom_call.1} parent=1 // pred_check_branch
      %33 = sbr.rel (0) target = $region13
    $region12: #{tpu_custom_call.1} parent=1 // pred_region
      %34 = dma.done [#allocation4], 256
    $region13: #{tpu_custom_call.1} parent=1 // pred_fallthru
      _
    // Predicated region
    $region14: #{tpu_custom_call.1} parent=1 // pred_check
      _
    $region15: #{tpu_custom_call.1} parent=1 // pred_check_branch
      %36 = sbr.rel (0) target = $region17
    $region16: #{tpu_custom_call.1} parent=1 // pred_region
      %37 = dma.done [#allocation7], 128
    $region17: #{tpu_custom_call.1} parent=1 // pred_fallthru
      _
    %v38 = vld [vmem:[#allocation6] sm:$0xff]
    %v39 = vld [vmem:[#allocation3] sm:$0xff]
    %v41 = vcombine.high %v39, %v39
    %43 = vst [vmem:[#allocation2] sm:$0xf] %v39
    %44 = vst [vmem:[#allocation2 + $0x8] sm:$0xf] %v41
    %45 = vrot.lane.b32.xlu0 %v39, 127
    %v46 = vpop.permute.xlu0 %45
    %47 = vrot.lane.b32.xlu0 %v41, 127
    %v48 = vpop.permute.xlu0 %47
    %v49 = vlaneseq
    %v50 = vand.u32 %v49, 127
    %vm51 = vcmp.lt.s32.totalorder %v50, 127
    %v52 = vsel %vm51, %v46, %v48
    %v53 = vsel %vm51, %v48, %v46
    %v56 = vrot.slane %v52, 4
    %v57 = vrot.slane %v53, 4
    %60 = vst [vmem:[#allocation2] sm:$0xf0] %v56
    %61 = vst [vmem:[#allocation2 + $0x8] sm:$0xf0] %v57
    %62 = vrot.lane.b32.xlu0 %v39, 126
    %v63 = vpop.permute.xlu0 %62
    %64 = vrot.lane.b32.xlu0 %v41, 126
    %v65 = vpop.permute.xlu0 %64
    %vm66 = vcmp.lt.s32.totalorder %v50, 126
    %v67 = vsel %vm66, %v63, %v65
    %v68 = vsel %vm66, %v65, %v63
    %69 = vst [vmem:[#allocation2 + $0x20] sm:$0xf] %v67
    %70 = vst [vmem:[#allocation2 + $0x28] sm:$0xf] %v68
    %71 = vrot.lane.b32.xlu0 %v39, 112
    %v72 = vpop.permute.xlu0 %71
    %73 = vrot.lane.b32.xlu0 %v41, 112
    %v74 = vpop.permute.xlu0 %73
    %vm75 = vcmp.lt.s32.totalorder %v50, 112
    %v76 = vsel %vm75, %v72, %v74
    %v77 = vsel %vm75, %v74, %v72
    %v80 = vrot.slane %v76, 4
    %v81 = vrot.slane %v77, 4
    %84 = vst [vmem:[#allocation2 + $0x20] sm:$0xf0] %v80
    %85 = vst [vmem:[#allocation2 + $0x28] sm:$0xf0] %v81
    %86 = vrot.lane.b32.xlu0 %v39, 111
    %v87 = vpop.permute.xlu0 %86
    %88 = vrot.lane.b32.xlu0 %v41, 111
    %v89 = vpop.permute.xlu0 %88
    %vm90 = vcmp.lt.s32.totalorder %v50, 111
    %v91 = vsel %vm90, %v87, %v89
    %v92 = vsel %vm90, %v89, %v87
    %93 = vst [vmem:[#allocation2 + $0x40] sm:$0xf] %v91
    %94 = vst [vmem:[#allocation2 + $0x48] sm:$0xf] %v92
    %95 = vrot.lane.b32.xlu0 %v39, 110
    %v96 = vpop.permute.xlu0 %95
    %97 = vrot.lane.b32.xlu0 %v41, 110
    %v98 = vpop.permute.xlu0 %97
    %vm99 = vcmp.lt.s32.totalorder %v50, 110
    %v100 = vsel %vm99, %v96, %v98
    %v101 = vsel %vm99, %v98, %v96
    %v104 = vrot.slane %v100, 4
    %v105 = vrot.slane %v101, 4
    %108 = vst [vmem:[#allocation2 + $0x40] sm:$0xf0] %v104
    %109 = vst [vmem:[#allocation2 + $0x48] sm:$0xf0] %v105
    %110 = vrot.lane.b32.xlu0 %v39, 96
    %v111 = vpop.permute.xlu0 %110
    %112 = vrot.lane.b32.xlu0 %v41, 96
    %v113 = vpop.permute.xlu0 %112
    %vm114 = vcmp.lt.s32.totalorder %v50, 96
    %v115 = vsel %vm114, %v111, %v113
    %v116 = vsel %vm114, %v113, %v111
    %117 = vst [vmem:[#allocation2 + $0x60] sm:$0xf] %v115
    %118 = vst [vmem:[#allocation2 + $0x68] sm:$0xf] %v116
    %119 = vrot.lane.b32.xlu0 %v39, 95
    %v120 = vpop.permute.xlu0 %119
    %121 = vrot.lane.b32.xlu0 %v41, 95
    %v122 = vpop.permute.xlu0 %121
    %vm123 = vcmp.lt.s32.totalorder %v50, 95
    %v124 = vsel %vm123, %v120, %v122
    %v125 = vsel %vm123, %v122, %v120
    %v128 = vrot.slane %v124, 4
    %v129 = vrot.slane %v125, 4
    %132 = vst [vmem:[#allocation2 + $0x60] sm:$0xf0] %v128
    %133 = vst [vmem:[#allocation2 + $0x68] sm:$0xf0] %v129
    %134 = vrot.lane.b32.xlu0 %v39, 94
    %v135 = vpop.permute.xlu0 %134
    %136 = vrot.lane.b32.xlu0 %v41, 94
    %v137 = vpop.permute.xlu0 %136
    %vm138 = vcmp.lt.s32.totalorder %v50, 94
    %v139 = vsel %vm138, %v135, %v137
    %v140 = vsel %vm138, %v137, %v135
    %141 = vst [vmem:[#allocation2 + $0x80] sm:$0xf] %v139
    %142 = vst [vmem:[#allocation2 + $0x88] sm:$0xf] %v140
    %s143 = scalar_lea.vmem [#allocation3], 8
    %v144 = vld [vmem:[%s143] sm:$0xff]
    %v146 = vcombine.high %v144, %v144
    %148 = vst [vmem:[#allocation2 + $0x10] sm:$0xf] %v144
    %149 = vst [vmem:[#allocation2 + $0x18] sm:$0xf] %v146
    %150 = vrot.lane.b32.xlu0 %v144, 127
    %v151 = vpop.permute.xlu0 %150
    %152 = vrot.lane.b32.xlu0 %v146, 127
    %v153 = vpop.permute.xlu0 %152
    %v154 = vsel %vm51, %v151, %v153
    %v155 = vsel %vm51, %v153, %v151
    %v158 = vrot.slane %v154, 4
    %v159 = vrot.slane %v155, 4
    %162 = vst [vmem:[#allocation2 + $0x10] sm:$0xf0] %v158
    %163 = vst [vmem:[#allocation2 + $0x18] sm:$0xf0] %v159
    %164 = vrot.lane.b32.xlu0 %v144, 126
    %v165 = vpop.permute.xlu0 %164
    %166 = vrot.lane.b32.xlu0 %v146, 126
    %v167 = vpop.permute.xlu0 %166
    %v168 = vsel %vm66, %v165, %v167
    %v169 = vsel %vm66, %v167, %v165
    %170 = vst [vmem:[#allocation2 + $0x30] sm:$0xf] %v168
    %171 = vst [vmem:[#allocation2 + $0x38] sm:$0xf] %v169
    %172 = vrot.lane.b32.xlu0 %v144, 112
    %v173 = vpop.permute.xlu0 %172
    %174 = vrot.lane.b32.xlu0 %v146, 112
    %v175 = vpop.permute.xlu0 %174
    %v176 = vsel %vm75, %v173, %v175
    %v177 = vsel %vm75, %v175, %v173
    %v180 = vrot.slane %v176, 4
    %v181 = vrot.slane %v177, 4
    %184 = vst [vmem:[#allocation2 + $0x30] sm:$0xf0] %v180
    %185 = vst [vmem:[#allocation2 + $0x38] sm:$0xf0] %v181
    %186 = vrot.lane.b32.xlu0 %v144, 111
    %v187 = vpop.permute.xlu0 %186
    %188 = vrot.lane.b32.xlu0 %v146, 111
    %v189 = vpop.permute.xlu0 %188
    %v190 = vsel %vm90, %v187, %v189
    %v191 = vsel %vm90, %v189, %v187
    %192 = vst [vmem:[#allocation2 + $0x50] sm:$0xf] %v190
    %193 = vst [vmem:[#allocation2 + $0x58] sm:$0xf] %v191
    %194 = vrot.lane.b32.xlu0 %v144, 110
    %v195 = vpop.permute.xlu0 %194
    %196 = vrot.lane.b32.xlu0 %v146, 110
    %v197 = vpop.permute.xlu0 %196
    %v198 = vsel %vm99, %v195, %v197
    %v199 = vsel %vm99, %v197, %v195
    %v202 = vrot.slane %v198, 4
    %v203 = vrot.slane %v199, 4
    %206 = vst [vmem:[#allocation2 + $0x50] sm:$0xf0] %v202
    %207 = vst [vmem:[#allocation2 + $0x58] sm:$0xf0] %v203
    %208 = vrot.lane.b32.xlu0 %v144, 96
    %v209 = vpop.permute.xlu0 %208
    %210 = vrot.lane.b32.xlu0 %v146, 96
    %v211 = vpop.permute.xlu0 %210
    %v212 = vsel %vm114, %v209, %v211
    %v213 = vsel %vm114, %v211, %v209
    %214 = vst [vmem:[#allocation2 + $0x70] sm:$0xf] %v212
    %215 = vst [vmem:[#allocation2 + $0x78] sm:$0xf] %v213
    %216 = vrot.lane.b32.xlu0 %v144, 95
    %v217 = vpop.permute.xlu0 %216
    %218 = vrot.lane.b32.xlu0 %v146, 95
    %v219 = vpop.permute.xlu0 %218
    %v220 = vsel %vm123, %v217, %v219
    %v221 = vsel %vm123, %v219, %v217
    %v224 = vrot.slane %v220, 4
    %v225 = vrot.slane %v221, 4
    %228 = vst [vmem:[#allocation2 + $0x70] sm:$0xf0] %v224
    %229 = vst [vmem:[#allocation2 + $0x78] sm:$0xf0] %v225
    %230 = vrot.lane.b32.xlu0 %v144, 94
    %v231 = vpop.permute.xlu0 %230
    %232 = vrot.lane.b32.xlu0 %v146, 94
    %v233 = vpop.permute.xlu0 %232
    %v234 = vsel %vm138, %v231, %v233
    %v235 = vsel %vm138, %v233, %v231
    %236 = vst [vmem:[#allocation2 + $0x90] sm:$0xf] %v234
    %237 = vst [vmem:[#allocation2 + $0x98] sm:$0xf] %v235
    %v238 = vld [vmem:[#allocation2] sm:$0xff]
    %v239 = vld [vmem:[#allocation2 + $0x8] sm:$0xff]
    %v240 = vld [vmem:[#allocation2 + $0x10] sm:$0xff]
    %v241 = vld [vmem:[#allocation2 + $0x18] sm:$0xff]
    %v242 = vld [vmem:[#allocation2 + $0x20] sm:$0xff]
    %v243 = vld [vmem:[#allocation2 + $0x28] sm:$0xff]
    %v244 = vld [vmem:[#allocation2 + $0x30] sm:$0xff]
    %v245 = vld [vmem:[#allocation2 + $0x38] sm:$0xff]
    %v246 = vld [vmem:[#allocation2 + $0x40] sm:$0xff]
    %v247 = vld [vmem:[#allocation2 + $0x48] sm:$0xff]
    %v248 = vld [vmem:[#allocation2 + $0x50] sm:$0xff]
    %v249 = vld [vmem:[#allocation2 + $0x58] sm:$0xff]
    %v250 = vld [vmem:[#allocation2 + $0x60] sm:$0xff]
    %v251 = vld [vmem:[#allocation2 + $0x68] sm:$0xff]
    %v252 = vld [vmem:[#allocation2 + $0x70] sm:$0xff]
    %v253 = vld [vmem:[#allocation2 + $0x78] sm:$0xff]
    %v254 = vld [vmem:[#allocation2 + $0x80] sm:$0xf]
    %v255 = vld [vmem:[#allocation2 + $0x88] sm:$0xf]
    %v256 = vld [vmem:[#allocation2 + $0x90] sm:$0xf]
    %v257 = vld [vmem:[#allocation2 + $0x98] sm:$0xf]
    %vm258 = vcmask 293888
    %v260 = vsel %vm258, %v38, 0
    %vm262 = vcmask 1043456
    %v264 = vsel %vm262, %v254, 0
    %v267 = vsel %vm262, %v255, 0
    %v270 = vsel %vm262, %v256, 0
    %v273 = vsel %vm262, %v257, 0
    %275 = vmatprep.subr.mxu0 0.0
    %276 = vmatpush1.msra.mxu0 0.0
    %277 = vmatprep.subr.mxu0 0.0
    %278 = vmatpush1.msra.mxu0 0.0
    %279 = vmatprep.subr.mxu0 0.0
    %280 = vmatpush1.msra.mxu0 0.0
    %281 = vmatprep.subr.mxu0 0.0
    %282 = vmatpush1.msra.mxu0 0.0
    %283 = vmatprep.subr.mxu0 0.0
    %284 = vmatpush1.msra.mxu0 0.0
    %285 = vmatprep.subr.mxu0 0.0
    %286 = vmatpush1.msra.mxu0 0.0
    %287 = vmatprep.subr.mxu0 0.0
    %288 = vmatpush1.msra.mxu0 0.0
    %289 = vmatprep.subr.mxu0 0.0
    %290 = vmatpush1.msra.mxu0 0.0
    %291 = vmatprep.subr.mxu0 0.0
    %292 = vmatpush1.msra.mxu0 0.0
    %293 = vmatprep.subr.mxu0 0.0
    %294 = vmatpush1.msra.mxu0 0.0
    %295 = vmatprep.subr.mxu0 0.0
    %296 = vmatpush1.msra.mxu0 0.0
    %297 = vmatprep.subr.mxu0 %v267
    %298 = vmatpush1.msra.mxu0 %v264
    %299 = vmatprep.subr.mxu0 %v251
    %300 = vmatpush1.msra.mxu0 %v250
    %301 = vmatprep.subr.mxu0 %v247
    %302 = vmatpush1.msra.mxu0 %v246
    %303 = vmatprep.subr.mxu0 %v243
    %304 = vmatpush1.msra.mxu0 %v242
    %305 = vmatprep.subr.mxu0 %v239
    %306 = vmatpush1.msra.mxu0 %v238
    %307 = vmatprep.subr.mxu0 0.0
    %308 = vmatpush2.msra.mxu0 0.0
    %309 = vmatprep.subr.mxu0 0.0
    %310 = vmatpush2.msra.mxu0 0.0
    %311 = vmatprep.subr.mxu0 0.0
    %312 = vmatpush2.msra.mxu0 0.0
    %313 = vmatprep.subr.mxu0 0.0
    %314 = vmatpush2.msra.mxu0 0.0
    %315 = vmatprep.subr.mxu0 0.0
    %316 = vmatpush2.msra.mxu0 0.0
    %317 = vmatprep.subr.mxu0 0.0
    %318 = vmatpush2.msra.mxu0 0.0
    %319 = vmatprep.subr.mxu0 0.0
    %320 = vmatpush2.msra.mxu0 0.0
    %321 = vmatprep.subr.mxu0 0.0
    %322 = vmatpush2.msra.mxu0 0.0
    %323 = vmatprep.subr.mxu0 0.0
    %324 = vmatpush2.msra.mxu0 0.0
    %325 = vmatprep.subr.mxu0 0.0
    %326 = vmatpush2.msra.mxu0 0.0
    %327 = vmatprep.subr.mxu0 0.0
    %328 = vmatpush2.msra.mxu0 0.0
    %329 = vmatprep.subr.mxu0 0.0
    %330 = vmatpush2.msra.mxu0 0.0
    %331 = vmatprep.subr.mxu0 0.0
    %332 = vmatpush2.msra.mxu0 0.0
    %333 = vmatprep.subr.mxu0 0.0
    %334 = vmatpush2.msra.mxu0 0.0
    %335 = vmatprep.subr.mxu0 0.0
    %336 = vmatpush2.msra.mxu0 0.0
    %337 = vmatprep.subr.mxu0 0.0
    %338 = vmatpush2.msra.mxu0 0.0
    %339 = vmatprep.mubr.f32.mxu0 0.0
    %340 = vmatmul.mubr.f32.gmra.mxu0 %v260
    %v341 = vpop.f32.mrf.mxu0
    %v342 = vadd.f32 0.0, %v341
    %v343 = vpop.f32.mrf.mxu0
    %v344 = vadd.f32 0.0, %v343
    %345 = vdwg.mxu0
    %346 = vmatprep.subr.mxu0 0.0
    %347 = vmatpush1.msra.mxu0 0.0
    %348 = vmatprep.subr.mxu0 0.0
    %349 = vmatpush1.msra.mxu0 0.0
    %350 = vmatprep.subr.mxu0 0.0
    %351 = vmatpush1.msra.mxu0 0.0
    %352 = vmatprep.subr.mxu0 0.0
    %353 = vmatpush1.msra.mxu0 0.0
    %354 = vmatprep.subr.mxu0 0.0
    %355 = vmatpush1.msra.mxu0 0.0
    %356 = vmatprep.subr.mxu0 0.0
    %357 = vmatpush1.msra.mxu0 0.0
    %358 = vmatprep.subr.mxu0 0.0
    %359 = vmatpush1.msra.mxu0 0.0
    %360 = vmatprep.subr.mxu0 0.0
    %361 = vmatpush1.msra.mxu0 0.0
    %362 = vmatprep.subr.mxu0 0.0
    %363 = vmatpush1.msra.mxu0 0.0
    %364 = vmatprep.subr.mxu0 0.0
    %365 = vmatpush1.msra.mxu0 0.0
    %366 = vmatprep.subr.mxu0 0.0
    %367 = vmatpush1.msra.mxu0 0.0
    %368 = vmatprep.subr.mxu0 %v273
    %369 = vmatpush1.msra.mxu0 %v270
    %370 = vmatprep.subr.mxu0 %v253
    %371 = vmatpush1.msra.mxu0 %v252
    %372 = vmatprep.subr.mxu0 %v249
    %373 = vmatpush1.msra.mxu0 %v248
    %374 = vmatprep.subr.mxu0 %v245
    %375 = vmatpush1.msra.mxu0 %v244
    %376 = vmatprep.subr.mxu0 %v241
    %377 = vmatpush1.msra.mxu0 %v240
    %378 = vmatprep.subr.mxu0 0.0
    %379 = vmatpush2.msra.mxu0 0.0
    %380 = vmatprep.subr.mxu0 0.0
    %381 = vmatpush2.msra.mxu0 0.0
    %382 = vmatprep.subr.mxu0 0.0
    %383 = vmatpush2.msra.mxu0 0.0
    %384 = vmatprep.subr.mxu0 0.0
    %385 = vmatpush2.msra.mxu0 0.0
    %386 = vmatprep.subr.mxu0 0.0
    %387 = vmatpush2.msra.mxu0 0.0
    %388 = vmatprep.subr.mxu0 0.0
    %389 = vmatpush2.msra.mxu0 0.0
    %390 = vmatprep.subr.mxu0 0.0
    %391 = vmatpush2.msra.mxu0 0.0
    %392 = vmatprep.subr.mxu0 0.0
    %393 = vmatpush2.msra.mxu0 0.0
    %394 = vmatprep.subr.mxu0 0.0
    %395 = vmatpush2.msra.mxu0 0.0
    %396 = vmatprep.subr.mxu0 0.0
    %397 = vmatpush2.msra.mxu0 0.0
    %398 = vmatprep.subr.mxu0 0.0
    %399 = vmatpush2.msra.mxu0 0.0
    %400 = vmatprep.subr.mxu0 0.0
    %401 = vmatpush2.msra.mxu0 0.0
    %402 = vmatprep.subr.mxu0 0.0
    %403 = vmatpush2.msra.mxu0 0.0
    %404 = vmatprep.subr.mxu0 0.0
    %405 = vmatpush2.msra.mxu0 0.0
    %406 = vmatprep.subr.mxu0 0.0
    %407 = vmatpush2.msra.mxu0 0.0
    %408 = vmatprep.subr.mxu0 0.0
    %409 = vmatpush2.msra.mxu0 0.0
    %410 = vmatprep.mubr.f32.mxu0 0.0
    %411 = vmatmul.mubr.f32.gmra.mxu0 %v260
    %v412 = vpop.f32.mrf.mxu0
    %v413 = vadd.f32 0.0, %v412
    %v414 = vpop.f32.mrf.mxu0
    %v415 = vadd.f32 0.0, %v414
    %416 = vdwg.mxu0
    %v417 = vmax.f32 %v342, 0.0
    %v418 = vmax.f32 %v344, 0.0
    %419 = vst [vmem:[#allocation8] sm:$0xff] %v417
    %420 = vst [vmem:[#allocation8 + $0x8] sm:$0xff] %v418
    %v421 = vmax.f32 %v413, 0.0
    %v422 = vmax.f32 %v415, 0.0
    %s423 = scalar_lea.vmem [#allocation8], 16
    %424 = vst [vmem:[%s423] sm:$0xff] %v421
    %425 = vst [vmem:[%s423 + $0x8] sm:$0xff] %v422
    // Predicated region
    $region18: #{tpu_custom_call.1} parent=1 // pred_check
      _
    $region19: #{tpu_custom_call.1} parent=1 // pred_check_branch
      %427 = sbr.rel (0) target = $region21
    $region20: #{tpu_custom_call.1} parent=1 // pred_region
      %s429 = ssub.s32 512, 512
      %430 = vsyncadd [#allocation5], %s429
      %s431 = sshll.u32 [#allocation8], 4
      %s432 = int_to_ptr.vmem [resolvable:$true] %s431
      %437 = dma.vmem_to_hbm [thread:$0]  %s432, 512, %s2, [#allocation5], 256, 256, 16
    $region21: #{tpu_custom_call.1} parent=1 // pred_fallthru
      _
    // Predicated region
    $region22: #{tpu_custom_call.1} parent=1 // pred_check
      _
    $region23: #{tpu_custom_call.1} parent=1 // pred_check_branch
      %439 = sbr.rel (0) target = $region25
    $region24: #{tpu_custom_call.1} parent=1 // pred_region
      %440 = dma.done [#allocation5], 512
    $region25: #{tpu_custom_call.1} parent=1 // pred_fallthru
      _
    %441 = vsyncpa [#allocation4], 1
    %442 = vsyncpa [#allocation7], 1
    %443 = vsyncpa [#allocation5], 1

</llo_original>
